<compile_context>
chip_gen: v5e
topology: v5e:2x2
jax: 0.10.0
libtpu: 0.0.40
codegen_flags: <defaults>
</compile_context>

<pallas_src>
import functools
import math

import jax
import jax.numpy as jnp
import numpy as np
from jax.experimental import pallas as pl
from jax.experimental.pallas import tpu as pltpu


# ------------------------------------------------------------------ kernel ---
def _anchor_kernel(tmpl_ref, out_ref, *, tile_w, stride, offset):
    """One tile of rows of the (W, H*A*4) anchor slab.

    tmpl_ref[0, j] = base[a, c] + (shift_y(iy) if c is a y-coord else 0)
    tmpl_ref[1, j] = 1.0 if c is an x-coord else 0.0
    with lane index j = iy*A*4 + a*4 + c (the full H*A*4 lane extent).

    out[ix, j] = tmpl_const[j] + mask_x[j] * shift_x(ix)
    where shift_x(ix) = (ix + offset) * stride varies only along sublanes.
    """
    t = pl.program_id(0)
    ix = jax.lax.broadcasted_iota(jnp.int32, (tile_w, 1), 0) + t * tile_w
    sx = (ix.astype(jnp.float32) + offset) * stride              # (tile_w, 1)
    tmpl = tmpl_ref[0:1, :]                                      # (1, L) const
    maskx = tmpl_ref[1:2, :]                                     # (1, L) x-mask
    out_ref[...] = tmpl + maskx * sx                             # (tile_w, L)


# ---------------------------------------------------- host-side constants ----
def _cell_anchors_np(size, aspect_ratios):
    """Same math as Anchor_Generator.generate_cell_anchors (host NumPy)."""
    sizes = list(size) if isinstance(size, (list, tuple)) else [size]
    ratios = (list(aspect_ratios) if isinstance(aspect_ratios, (list, tuple))
              else [aspect_ratios])
    rows = []
    for s in sizes:
        for r in ratios:
            a_w = math.sqrt(s * s / r)
            a_h = a_w * r
            rows.append([-a_w / 2.0, -a_h / 2.0, a_w / 2.0, a_h / 2.0])
    return np.asarray(rows, dtype=np.float32)                     # (A, 4)


def _row_template_np(H, stride, offset, base):
    """(2, H*A*4) lane template: row 0 = const part, row 1 = shift_x mask."""
    A = base.shape[0]
    a4 = A * 4
    base_flat = base.reshape(a4)
    is_x = np.tile(np.array([1.0, 0.0, 1.0, 0.0], np.float32), A)     # (a4,)
    sy = (np.arange(H, dtype=np.float32) + np.float32(offset)) * np.float32(stride)
    const = base_flat[None, :] + (1.0 - is_x)[None, :] * sy[:, None]  # (H, a4)
    maskx = np.tile(is_x, H)                                          # (H*a4,)
    return np.stack([const.reshape(-1), maskx]).astype(np.float32)    # (2, L)


# ----------------------------------------------------------------- wrapper ---
_VMEM_BLOCK_BYTES = 4 * 1024 * 1024  # per output block (Pallas double-buffers)


def _grid_anchors_one_level(grid_hw, stride, anchor_size, aspect_ratios, offset):
    H, W = int(grid_hw[0]), int(grid_hw[1])
    base = _cell_anchors_np(anchor_size, aspect_ratios)               # (A, 4)
    A = base.shape[0]
    L = H * A * 4

    tmpl = jnp.asarray(_row_template_np(H, stride, offset, base))     # (2, L)

    # Tile only over W; the block lane dim is always the full L, so the store
    # path and HBM writeback are contiguous.  Whole level in one block when it
    # fits the budget, else multiple-of-8 row tiles with a cdiv grid (no
    # divisibility requirement -- Pallas masks the partial boundary block).
    budget_rows = max(8, _VMEM_BLOCK_BYTES // (L * 4))
    tile_w = W if W <= budget_rows else (budget_rows // 8) * 8
    grid = (pl.cdiv(W, tile_w),)

    kernel = functools.partial(_anchor_kernel, tile_w=tile_w,
                               stride=float(stride), offset=float(offset))

    slab = pl.pallas_call(
        kernel,
        out_shape=jax.ShapeDtypeStruct((W, L), jnp.float32),
        grid=grid,
        in_specs=[pl.BlockSpec((2, L), lambda t: (0, 0))],
        out_specs=pl.BlockSpec((tile_w, L), lambda t: (t, 0)),
        compiler_params=pltpu.CompilerParams(
            dimension_semantics=("parallel",)),
    )(tmpl)

    # Row-major memory order already matches (H*W*A, 4): free reshape.
    return slab.reshape(W * H * A, 4)


class AnchorGeneratorPallas:
    """JAX/Pallas port of Anchor_Generator (forward semantics preserved)."""

    def __init__(self, anchor_sizes, aspect_ratios, strides, offset=0.5):
        self.anchor_sizes = anchor_sizes
        self.aspect_ratios = aspect_ratios
        self.strides = strides
        self.offset = offset
        self._cache = {}   # anchors depend only on static shapes -> cache them

    def _level_key(self, grid_hw, stride, anchor_size):
        asz = (tuple(anchor_size) if isinstance(anchor_size, (list, tuple))
               else float(anchor_size))
        return (int(grid_hw[0]), int(grid_hw[1]), float(stride), asz)

    def __call__(self, input_features):
        # input_features: dict[name -> NCHW array]; only spatial shapes used.
        grid_sizes = [f.shape[2:] for _, f in input_features.items()]
        out = []
        for grid_hw, stride, anchor_size in zip(
                grid_sizes, self.strides, self.anchor_sizes):
            key = self._level_key(grid_hw, stride, anchor_size)
            if key not in self._cache:
                self._cache[key] = _grid_anchors_one_level(
                    grid_hw, stride, anchor_size, self.aspect_ratios, self.offset)
            out.append(self._cache[key])
        # TODO(synk): PyTorch wraps each level in a `Boxes` container (not
        # defined in the snippet); we return the raw (H*W*A, 4) arrays.
        return out


# --------------------------------------------------------------- reference ---
def _reference_one_level(grid_hw, stride, anchor_size, aspect_ratios, offset):
    H, W = grid_hw
    base = _cell_anchors_np(anchor_size, aspect_ratios)               # (A, 4)
    shift_x = np.arange(offset * stride, W * stride, step=stride, dtype=np.float32)
    shift_y = np.arange(offset * stride, H * stride, step=stride, dtype=np.float32)
    sx, sy = np.meshgrid(shift_x, shift_y, indexing="ij")             # (W, H)
    sx, sy = sx.reshape(-1), sy.reshape(-1)
    shifts = np.stack((sx, sy, sx, sy), axis=1)                       # (W*H, 4)
    return (shifts.reshape(-1, 1, 4) + base.reshape(1, -1, 4)).reshape(-1, 4)


# -------------------------------------------------------------------- main ---
if __name__ == "__main__":
    key = jax.random.PRNGKey(0)
    k1, k2, k3 = jax.random.split(key, 3)

    # Three feature levels (NCHW): batch=2, channels=4; the third level has
    # odd spatial dims to exercise the no-divisibility-assert path.
    feats = {
        "p3": jax.random.normal(k1, (2, 4, 16, 16), dtype=jnp.float32),
        "p4": jax.random.normal(k2, (2, 4, 8, 8), dtype=jnp.float32),
        "p5": jax.random.normal(k3, (2, 4, 9, 7), dtype=jnp.float32),
    }

    anchor_sizes = [32.0, 64.0, 128.0]
    aspect_ratios = [0.5, 1.0, 2.0]
    strides = [8, 16, 32]
    offset = 0.5

    gen = AnchorGeneratorPallas(anchor_sizes, aspect_ratios, strides, offset)
    anchors = gen(feats)
    anchors = [jax.block_until_ready(a) for a in anchors]

    # sanity-check against a NumPy re-implementation of the PyTorch semantics
    grid_sizes = [f.shape[2:] for f in feats.values()]
    for a, gs, st, asz in zip(anchors, grid_sizes, strides, anchor_sizes):
        ref = _reference_one_level(gs, st, asz, aspect_ratios, offset)
        assert a.shape == ref.shape, (a.shape, ref.shape)
        np.testing.assert_allclose(np.asarray(a), ref, rtol=1e-6, atol=1e-4)

    # second call must hit the cache (no new kernel launches) and stay correct
    anchors2 = gen(feats)
    for a, b in zip(anchors, anchors2):
        assert a is b

    print("KERNEL_OK")
</pallas_src>

<mosaic_0001>
module attributes {stable_mosaic.version = 11 : i64} {
  func.func @_anchor_kernel(%arg0: i32, %arg1: memref<2x192xf32, #tpu.memory_space<vmem>>, %arg2: memref<16x192xf32, #tpu.memory_space<vmem>>) attributes {dimension_semantics = [#tpu.dimension_semantics<parallel>], iteration_bounds = array<i64: 1>, scalar_prefetch = 0 : i64, scratch_operands = 0 : i64, tpu.core_type = #tpu.core_type<tc>, window_params = [{pipeline_mode = #tpu.pipeline_mode<synchronous>, transform_indices = @transform_0, window_bounds = array<i64: 2, 192>}, {transform_indices = @transform_1, window_bounds = array<i64: 16, 192>}]} {
    %0 = tpu.iota {dimensions = array<i32: 0>} : vector<16x1xi32>
    %c16_i32 = arith.constant 16 : i32
    %1 = arith.muli %arg0, %c16_i32 : i32
    %2 = vector.broadcast %1 : i32 to vector<16x1xi32>
    %3 = arith.addi %0, %2 : vector<16x1xi32>
    %4 = arith.sitofp %3 : vector<16x1xi32> to vector<16x1xf32>
    %cst = arith.constant 5.000000e-01 : f32
    %5 = vector.broadcast %cst : f32 to vector<16x1xf32>
    %6 = arith.addf %4, %5 : vector<16x1xf32>
    %cst_0 = arith.constant 8.000000e+00 : f32
    %7 = vector.broadcast %cst_0 : f32 to vector<16x1xf32>
    %8 = arith.mulf %6, %7 : vector<16x1xf32>
    %c0 = arith.constant 0 : index
    %c0_1 = arith.constant 0 : index
    %9 = vector.load %arg1[%c0, %c0_1] : memref<2x192xf32, #tpu.memory_space<vmem>>, vector<1x192xf32>
    %c1 = arith.constant 1 : index
    %c0_2 = arith.constant 0 : index
    %10 = vector.load %arg1[%c1, %c0_2] : memref<2x192xf32, #tpu.memory_space<vmem>>, vector<1x192xf32>
    %11 = vector.broadcast %10 : vector<1x192xf32> to vector<16x192xf32>
    %12 = vector.broadcast %8 : vector<16x1xf32> to vector<16x192xf32>
    %13 = arith.mulf %11, %12 : vector<16x192xf32>
    %14 = vector.broadcast %9 : vector<1x192xf32> to vector<16x192xf32>
    %15 = arith.addf %14, %13 : vector<16x192xf32>
    %c0_3 = arith.constant 0 : index
    %c0_4 = arith.constant 0 : index
    %16 = vector.load %arg2[%c0_3, %c0_4] : memref<16x192xf32, #tpu.memory_space<vmem>>, vector<16x192xf32>
    tpu.vector_store %arg2[%c0_3, %c0_4], %15 {strides = array<i32>} : memref<16x192xf32, #tpu.memory_space<vmem>>, vector<16x192xf32>,
    return
  }
  func.func @transform_0(%arg0: i32) -> (i32, i32) {
    %c0_i32 = arith.constant 0 : i32
    %c0_i32_0 = arith.constant 0 : i32
    %c0_i32_1 = arith.constant 0 : i32
    return %c0_i32, %c0_i32_0 : i32, i32
  }
  func.func @transform_1(%arg0: i32) -> (i32, i32) {
    %c0_i32 = arith.constant 0 : i32
    %c0_i32_0 = arith.constant 0 : i32
    return %arg0, %c0_i32 : i32, i32
  }
}

</mosaic_0001>

<llo_original>
// kernel: tpu_custom_call.1
$region0: #{tpu_custom_call.1}
  #allocation0 [shape = 'u32[]', space=smem, size = 0x4, offset = 0x4, fixed_abs, tag = 'smem constant byte address 0x4 - core index']
  #allocation1 [shape = 'u32[72,128]{1,0:T(1,128)}', space=vmem, size = 0x9000, scoped, tag = 'internal scratch']
  %s0 = inlined_call_operand.hbm [shape: f32[2,192], index: 0, kind: input, shape index: {}]
  %s1 = inlined_call_operand.hbm [shape: f32[16,192], index: 1, kind: output, shape index: {}]
  %s2 = sld [smem:[#allocation0]]
  $region18: #{tpu_custom_call.1} parent=0
    _
  %s4 = ssub.s32 1, %s2
  %s5 = scalar_select 0, %s4, %s2
  $region1: #{tpu_custom_call.1} parent=0
    #allocation2 [shape = 'u8[2048]{0}', space=vmem, size = 0x800, scoped, tag = 'input window, operand 0, single buffered']
    #allocation3 [shape = 's32[1]{0}', space=sflag, size = 0x4, scoped, tag = 'scoped memory for tpu_custom_call.1']
    #allocation4 [shape = 's32[1]{0}', space=sflag, size = 0x4, scoped, tag = 'scoped memory for tpu_custom_call.1']
    #allocation5 [shape = 'u8[16384]{0}', space=vmem, size = 0x4000, scoped, tag = 'output window, operand 0, single buffered']
    %6 = vsyncpa [#allocation3], 0
    %7 = vsyncpa [#allocation4], 0
    // Predicated region
    $region2: #{tpu_custom_call.1} parent=1 // pred_check
      _
    $region3: #{tpu_custom_call.1} parent=1 // pred_check_branch
      %9 = sbr.rel (0) target = $region5
    $region4: #{tpu_custom_call.1} parent=1 // pred_region
      %11 = vsyncadd [#allocation3], 0
      %s13 = sshll.u32 %s0, 4
      %s14 = int_to_ptr.hbm [resolvable:$true] %s13
      %s15 = sshll.u32 [#allocation2], 4
      %s16 = int_to_ptr.vmem [resolvable:$true] %s15
      %18 = dma.hbm_to_vmem [thread:$0]  %s14, 64, %s16, [#allocation3]
    $region5: #{tpu_custom_call.1} parent=1 // pred_fallthru
      _
    // Predicated region
    $region6: #{tpu_custom_call.1} parent=1 // pred_check
      _
    $region7: #{tpu_custom_call.1} parent=1 // pred_check_branch
      %20 = sbr.rel (0) target = $region9
    $region8: #{tpu_custom_call.1} parent=1 // pred_region
      %22 = dma.done [#allocation3], 64
    $region9: #{tpu_custom_call.1} parent=1 // pred_fallthru
      _
    %v23 = vlaneseq
    %v24 = vshrl.u32 %v23, 7
    %v25 = vadd.s32 %v24, 8
    %s26 = smul.u32 0, 16
    %v27 = vstv %s26
    %v28 = vadd.s32 %v24, %v27
    %v29 = vadd.s32 %v25, %v27
    %v30 = vcvt.s32.f32 %v28
    %v31 = vcvt.s32.f32 %v29
    %v32 = vadd.f32 %v30, 0.5
    %v33 = vadd.f32 %v31, 0.5
    %v34 = vmul.f32 %v32, 8.0
    %v35 = vmul.f32 %v33, 8.0
    %v36 = vld [vmem:[#allocation2] ss:$2 sm:$0x3]
    %s37 = scalar_lea.vmem [#allocation2], 1
    %v38 = vld [vmem:[%s37] ss:$2 sm:$0x3]
    %v40 = vperm.slane %v38, 0
    %v41 = vperm.slane %v38, 1
    %v44 = vmul.f32 %v40, %v34
    %v45 = vmul.f32 %v41, %v34
    %v46 = vmul.f32 %v40, %v35
    %v47 = vmul.f32 %v41, %v35
    %v49 = vperm.slane %v36, 0
    %v50 = vperm.slane %v36, 1
    %v53 = vadd.f32 %v49, %v44
    %v54 = vadd.f32 %v50, %v45
    %v55 = vadd.f32 %v49, %v46
    %v56 = vadd.f32 %v50, %v47
    %57 = vst [vmem:[#allocation5] sm:$0xff] %v53
    %vm58 = vcmask 523264
    %59 = vst.msk [vmem:[#allocation5 + $0x8] sm:$0xff] %vm58, %v54
    %60 = vst [vmem:[#allocation5 + $0x10] sm:$0xff] %v55
    %61 = vst.msk [vmem:[#allocation5 + $0x18] sm:$0xff] %vm58, %v56
    // Predicated region
    $region10: #{tpu_custom_call.1} parent=1 // pred_check
      _
    $region11: #{tpu_custom_call.1} parent=1 // pred_check_branch
      %63 = sbr.rel (0) target = $region13
    $region12: #{tpu_custom_call.1} parent=1 // pred_region
      %65 = vsyncadd [#allocation4], 0
      %s66 = sshll.u32 [#allocation5], 4
      %s67 = int_to_ptr.vmem [resolvable:$true] %s66
      %s68 = sshll.u32 %s1, 4
      %s69 = int_to_ptr.hbm [resolvable:$true] %s68
      %74 = dma.vmem_to_hbm [thread:$0]  %s67, 512, %s69, [#allocation4], 256, 256, 16
    $region13: #{tpu_custom_call.1} parent=1 // pred_fallthru
      _
    // Predicated region
    $region14: #{tpu_custom_call.1} parent=1 // pred_check
      _
    $region15: #{tpu_custom_call.1} parent=1 // pred_check_branch
      %76 = sbr.rel (0) target = $region17
    $region16: #{tpu_custom_call.1} parent=1 // pred_region
      %78 = dma.done [#allocation4], 512
    $region17: #{tpu_custom_call.1} parent=1 // pred_fallthru
      _
    %79 = vsyncpa [#allocation3], 1
    %80 = vsyncpa [#allocation4], 1

</llo_original>
